<compile_context>
chip_gen: v7x
topology: tpu7x:2x2x1
jax: 0.10.0
libtpu: 0.0.40
codegen_flags: <defaults>
</compile_context>

<pallas_src>
import math
import functools

import jax
import jax.numpy as jnp
from jax.experimental import pallas as pl
from jax.experimental.pallas import tpu as pltpu


def _simple_rnn_kernel(ids_ref, emb_ref, w_ih_ref, b_in_ref, w_hh_ref,
                       w_ho_ref, b_ho_ref, out_ref, xs_ref,
                       *, seq_len, max_norm):
    # ids_ref : (S,)  int32  SMEM   -- token indices
    # emb_ref : (V,1,E)      VMEM   -- full embedding table, resident
    # w_ih    : (E,H), b_in: (1,H) = b_ih + b_hh, w_hh: (H,H), w_ho: (H,O), b_ho: (1,O)
    # out_ref : (1,O) VMEM
    # xs_ref  : (S,E) f32 VMEM scratch -- gathered embedding rows

    # 1) Gather the S embedding rows into a contiguous (S, E) slab.
    #    Dynamic index on the leading (untiled) dim of the VMEM table is cheap.
    for t in range(seq_len):
        idx = ids_ref[t]
        xs_ref[pl.ds(t, 1), :] = emb_ref[idx].astype(jnp.float32)   # (1, E)

    # 2) nn.Embedding(max_norm=1) renorm, vectorized over all S rows at once.
    rows = xs_ref[...]                                              # (S, E) f32
    nrm = jnp.sqrt(jnp.sum(rows * rows, axis=-1, keepdims=True))    # (S, 1)
    scale = jnp.where(nrm > max_norm, max_norm / (nrm + 1e-7), jnp.float32(1.0))
    rows = rows * scale

    # 3) Hoisted input projection for every timestep in one MXU matmul,
    #    with the pre-summed bias (b_ih + b_hh) folded in.
    xs = jnp.dot(rows, w_ih_ref[...],
                 preferred_element_type=jnp.float32) + b_in_ref[...]   # (S, H)

    # 4) Sequential Elman recurrence; hidden state stays register-resident.
    w_hh = w_hh_ref[...]
    h = jnp.zeros((1, xs.shape[1]), dtype=jnp.float32)
    for t in range(seq_len):                                        # fully unrolled
        h = jnp.tanh(xs[t:t + 1, :]
                     + jnp.dot(h, w_hh, preferred_element_type=jnp.float32))

    # 5) Output projection + log-softmax (dim=1), single write.
    logits = (jnp.dot(h, w_ho_ref[...], preferred_element_type=jnp.float32)
              + b_ho_ref[...])                                       # (1, O)
    m = jnp.max(logits, axis=-1, keepdims=True)
    z = logits - m
    lse = jnp.log(jnp.sum(jnp.exp(z), axis=-1, keepdims=True))
    out_ref[...] = (z - lse).astype(out_ref.dtype)


def simple_rnn_forward(token_ids, emb_table, w_ih, b_ih, w_hh, b_hh, w_ho, b_ho,
                       *, max_norm=1.0):
    """token_ids: (S, 1) int; emb_table: (V, E); weights stored as (in, out).

    Returns log-probabilities of shape (1, O), matching SimpleRNN.forward.
    """
    S = token_ids.shape[0]
    V, E = emb_table.shape
    H = w_hh.shape[0]
    O = w_ho.shape[1]

    ids = token_ids.reshape(S).astype(jnp.int32)
    emb3 = emb_table.reshape(V, 1, E)                    # leading-dim row indexing
    b_in = (b_ih.reshape(1, H) + b_hh.reshape(1, H)).astype(jnp.float32)
    b_ho2 = b_ho.reshape(1, O).astype(jnp.float32)

    kernel = functools.partial(_simple_rnn_kernel, seq_len=S,
                               max_norm=float(max_norm))

    return pl.pallas_call(
        kernel,
        out_shape=jax.ShapeDtypeStruct((1, O), jnp.float32),
        in_specs=[
            pl.BlockSpec(memory_space=pltpu.MemorySpace.SMEM),   # token ids
            pl.BlockSpec(memory_space=pltpu.MemorySpace.VMEM),   # embedding table
            pl.BlockSpec(memory_space=pltpu.MemorySpace.VMEM),   # W_ih
            pl.BlockSpec(memory_space=pltpu.MemorySpace.VMEM),   # b_ih + b_hh
            pl.BlockSpec(memory_space=pltpu.MemorySpace.VMEM),   # W_hh
            pl.BlockSpec(memory_space=pltpu.MemorySpace.VMEM),   # W_ho
            pl.BlockSpec(memory_space=pltpu.MemorySpace.VMEM),   # b_ho
        ],
        out_specs=pl.BlockSpec(memory_space=pltpu.MemorySpace.VMEM),
        scratch_shapes=[pltpu.VMEM((S, E), jnp.float32)],        # gathered rows
    )(ids, emb3, w_ih, b_in, w_hh, w_ho, b_ho2)


def simple_rnn_predict(*args, **kwargs):
    """Equivalent of SimpleRNN.predict: argmax over the log-probabilities."""
    return jnp.argmax(simple_rnn_forward(*args, **kwargs))


def _reference_forward(token_ids, emb_table, w_ih, b_ih, w_hh, b_hh, w_ho, b_ho,
                       max_norm=1.0):
    """Pure-JAX reference with identical semantics (for verification)."""
    ids = token_ids.reshape(-1)
    emb = emb_table[ids]                                            # (S, E)
    nrm = jnp.sqrt(jnp.sum(emb * emb, axis=-1, keepdims=True))
    scale = jnp.where(nrm > max_norm, max_norm / (nrm + 1e-7), 1.0)
    emb = emb * scale
    H = w_hh.shape[0]
    h = jnp.zeros((1, H), dtype=jnp.float32)
    for t in range(emb.shape[0]):
        word = emb[t:t + 1]                                         # (1, E)
        h = jnp.tanh(word @ w_ih + b_ih.reshape(1, -1)
                     + h @ w_hh + b_hh.reshape(1, -1))
    logits = h @ w_ho + b_ho.reshape(1, -1)                         # (1, O)
    return jax.nn.log_softmax(logits, axis=1)


if __name__ == "__main__":
    # Small shapes consistent with the module: seq=8, input_size=1 (indices),
    # vocab=50, embedding_dim=32, hidden=32, output=8.
    S, V, E, H, O = 8, 50, 32, 32, 8

    key = jax.random.PRNGKey(0)
    k_ids, k_emb, k1, k2, k3, k4, k5, k6 = jax.random.split(key, 8)

    token_ids = jax.random.randint(k_ids, (S, 1), 0, V, dtype=jnp.int32)
    # Some rows will have norm > 1, exercising the max_norm renorm path.
    emb_table = jax.random.normal(k_emb, (V, E), dtype=jnp.float32) * 0.5
    w_ih = jax.random.normal(k1, (E, H), dtype=jnp.float32) / math.sqrt(E)
    b_ih = jax.random.normal(k2, (H,), dtype=jnp.float32) * 0.1
    w_hh = jax.random.normal(k3, (H, H), dtype=jnp.float32) / math.sqrt(H)
    b_hh = jax.random.normal(k4, (H,), dtype=jnp.float32) * 0.1
    w_ho = jax.random.normal(k5, (H, O), dtype=jnp.float32) / math.sqrt(H)
    b_ho = jax.random.normal(k6, (O,), dtype=jnp.float32) * 0.1

    out = simple_rnn_forward(token_ids, emb_table, w_ih, b_ih, w_hh, b_hh, w_ho, b_ho)
    out = jax.block_until_ready(out)
    assert out.shape == (1, O)

    ref = _reference_forward(token_ids, emb_table, w_ih, b_ih, w_hh, b_hh, w_ho, b_ho)
    assert jnp.allclose(out, ref, atol=1e-5, rtol=1e-5), "kernel output mismatch vs reference"
    # Log-softmax sanity: probabilities sum to 1.
    assert jnp.allclose(jnp.sum(jnp.exp(out)), 1.0, atol=1e-5)
    # predict() equivalent agrees with reference argmax.
    assert int(jnp.argmax(out)) == int(jnp.argmax(ref))

    print("KERNEL_OK")
</pallas_src>

<mosaic_0001>
module attributes {stable_mosaic.version = 11 : i64} {
  func.func @_simple_rnn_kernel(%arg0: memref<8xi32, #tpu.memory_space<smem>>, %arg1: memref<50x1x32xf32, #tpu.memory_space<vmem>>, %arg2: memref<32x32xf32, #tpu.memory_space<vmem>>, %arg3: memref<1x32xf32, #tpu.memory_space<vmem>>, %arg4: memref<32x32xf32, #tpu.memory_space<vmem>>, %arg5: memref<32x8xf32, #tpu.memory_space<vmem>>, %arg6: memref<1x8xf32, #tpu.memory_space<vmem>>, %arg7: memref<1x8xf32, #tpu.memory_space<vmem>>, %arg8: memref<8x32xf32, #tpu.memory_space<vmem>>) attributes {dimension_semantics = [], scalar_prefetch = 0 : i64, scratch_operands = 1 : i64, tpu.core_type = #tpu.core_type<tc>} {
    %c0 = arith.constant 0 : index
    %0 = memref.load %arg0[%c0] : memref<8xi32, #tpu.memory_space<smem>>
    %1 = arith.index_cast %0 : i32 to index
    %c0_0 = arith.constant 0 : index
    %c0_1 = arith.constant 0 : index
    %2 = vector.load %arg1[%1, %c0_0, %c0_1] : memref<50x1x32xf32, #tpu.memory_space<vmem>>, vector<1x1x32xf32>
    %3 = vector.shape_cast %2 : vector<1x1x32xf32> to vector<1x32xf32>
    %c0_2 = arith.constant 0 : index
    %c0_3 = arith.constant 0 : index
    %4 = vector.load %arg8[%c0_2, %c0_3] : memref<8x32xf32, #tpu.memory_space<vmem>>, vector<1x32xf32>
    tpu.vector_store %arg8[%c0_2, %c0_3], %3 {strides = array<i32>} : memref<8x32xf32, #tpu.memory_space<vmem>>, vector<1x32xf32>,
    %c1 = arith.constant 1 : index
    %5 = memref.load %arg0[%c1] : memref<8xi32, #tpu.memory_space<smem>>
    %6 = arith.index_cast %5 : i32 to index
    %c0_4 = arith.constant 0 : index
    %c0_5 = arith.constant 0 : index
    %7 = vector.load %arg1[%6, %c0_4, %c0_5] : memref<50x1x32xf32, #tpu.memory_space<vmem>>, vector<1x1x32xf32>
    %8 = vector.shape_cast %7 : vector<1x1x32xf32> to vector<1x32xf32>
    %c1_6 = arith.constant 1 : index
    %c0_7 = arith.constant 0 : index
    %9 = vector.load %arg8[%c1_6, %c0_7] : memref<8x32xf32, #tpu.memory_space<vmem>>, vector<1x32xf32>
    tpu.vector_store %arg8[%c1_6, %c0_7], %8 {strides = array<i32>} : memref<8x32xf32, #tpu.memory_space<vmem>>, vector<1x32xf32>,
    %c2 = arith.constant 2 : index
    %10 = memref.load %arg0[%c2] : memref<8xi32, #tpu.memory_space<smem>>
    %11 = arith.index_cast %10 : i32 to index
    %c0_8 = arith.constant 0 : index
    %c0_9 = arith.constant 0 : index
    %12 = vector.load %arg1[%11, %c0_8, %c0_9] : memref<50x1x32xf32, #tpu.memory_space<vmem>>, vector<1x1x32xf32>
    %13 = vector.shape_cast %12 : vector<1x1x32xf32> to vector<1x32xf32>
    %c2_10 = arith.constant 2 : index
    %c0_11 = arith.constant 0 : index
    %14 = vector.load %arg8[%c2_10, %c0_11] : memref<8x32xf32, #tpu.memory_space<vmem>>, vector<1x32xf32>
    tpu.vector_store %arg8[%c2_10, %c0_11], %13 {strides = array<i32>} : memref<8x32xf32, #tpu.memory_space<vmem>>, vector<1x32xf32>,
    %c3 = arith.constant 3 : index
    %15 = memref.load %arg0[%c3] : memref<8xi32, #tpu.memory_space<smem>>
    %16 = arith.index_cast %15 : i32 to index
    %c0_12 = arith.constant 0 : index
    %c0_13 = arith.constant 0 : index
    %17 = vector.load %arg1[%16, %c0_12, %c0_13] : memref<50x1x32xf32, #tpu.memory_space<vmem>>, vector<1x1x32xf32>
    %18 = vector.shape_cast %17 : vector<1x1x32xf32> to vector<1x32xf32>
    %c3_14 = arith.constant 3 : index
    %c0_15 = arith.constant 0 : index
    %19 = vector.load %arg8[%c3_14, %c0_15] : memref<8x32xf32, #tpu.memory_space<vmem>>, vector<1x32xf32>
    tpu.vector_store %arg8[%c3_14, %c0_15], %18 {strides = array<i32>} : memref<8x32xf32, #tpu.memory_space<vmem>>, vector<1x32xf32>,
    %c4 = arith.constant 4 : index
    %20 = memref.load %arg0[%c4] : memref<8xi32, #tpu.memory_space<smem>>
    %21 = arith.index_cast %20 : i32 to index
    %c0_16 = arith.constant 0 : index
    %c0_17 = arith.constant 0 : index
    %22 = vector.load %arg1[%21, %c0_16, %c0_17] : memref<50x1x32xf32, #tpu.memory_space<vmem>>, vector<1x1x32xf32>
    %23 = vector.shape_cast %22 : vector<1x1x32xf32> to vector<1x32xf32>
    %c4_18 = arith.constant 4 : index
    %c0_19 = arith.constant 0 : index
    %24 = vector.load %arg8[%c4_18, %c0_19] : memref<8x32xf32, #tpu.memory_space<vmem>>, vector<1x32xf32>
    tpu.vector_store %arg8[%c4_18, %c0_19], %23 {strides = array<i32>} : memref<8x32xf32, #tpu.memory_space<vmem>>, vector<1x32xf32>,
    %c5 = arith.constant 5 : index
    %25 = memref.load %arg0[%c5] : memref<8xi32, #tpu.memory_space<smem>>
    %26 = arith.index_cast %25 : i32 to index
    %c0_20 = arith.constant 0 : index
    %c0_21 = arith.constant 0 : index
    %27 = vector.load %arg1[%26, %c0_20, %c0_21] : memref<50x1x32xf32, #tpu.memory_space<vmem>>, vector<1x1x32xf32>
    %28 = vector.shape_cast %27 : vector<1x1x32xf32> to vector<1x32xf32>
    %c5_22 = arith.constant 5 : index
    %c0_23 = arith.constant 0 : index
    %29 = vector.load %arg8[%c5_22, %c0_23] : memref<8x32xf32, #tpu.memory_space<vmem>>, vector<1x32xf32>
    tpu.vector_store %arg8[%c5_22, %c0_23], %28 {strides = array<i32>} : memref<8x32xf32, #tpu.memory_space<vmem>>, vector<1x32xf32>,
    %c6 = arith.constant 6 : index
    %30 = memref.load %arg0[%c6] : memref<8xi32, #tpu.memory_space<smem>>
    %31 = arith.index_cast %30 : i32 to index
    %c0_24 = arith.constant 0 : index
    %c0_25 = arith.constant 0 : index
    %32 = vector.load %arg1[%31, %c0_24, %c0_25] : memref<50x1x32xf32, #tpu.memory_space<vmem>>, vector<1x1x32xf32>
    %33 = vector.shape_cast %32 : vector<1x1x32xf32> to vector<1x32xf32>
    %c6_26 = arith.constant 6 : index
    %c0_27 = arith.constant 0 : index
    %34 = vector.load %arg8[%c6_26, %c0_27] : memref<8x32xf32, #tpu.memory_space<vmem>>, vector<1x32xf32>
    tpu.vector_store %arg8[%c6_26, %c0_27], %33 {strides = array<i32>} : memref<8x32xf32, #tpu.memory_space<vmem>>, vector<1x32xf32>,
    %c7 = arith.constant 7 : index
    %35 = memref.load %arg0[%c7] : memref<8xi32, #tpu.memory_space<smem>>
    %36 = arith.index_cast %35 : i32 to index
    %c0_28 = arith.constant 0 : index
    %c0_29 = arith.constant 0 : index
    %37 = vector.load %arg1[%36, %c0_28, %c0_29] : memref<50x1x32xf32, #tpu.memory_space<vmem>>, vector<1x1x32xf32>
    %38 = vector.shape_cast %37 : vector<1x1x32xf32> to vector<1x32xf32>
    %c7_30 = arith.constant 7 : index
    %c0_31 = arith.constant 0 : index
    %39 = vector.load %arg8[%c7_30, %c0_31] : memref<8x32xf32, #tpu.memory_space<vmem>>, vector<1x32xf32>
    tpu.vector_store %arg8[%c7_30, %c0_31], %38 {strides = array<i32>} : memref<8x32xf32, #tpu.memory_space<vmem>>, vector<1x32xf32>,
    %c0_32 = arith.constant 0 : index
    %c0_33 = arith.constant 0 : index
    %40 = vector.load %arg8[%c0_32, %c0_33] : memref<8x32xf32, #tpu.memory_space<vmem>>, vector<8x32xf32>
    %41 = arith.mulf %40, %40 : vector<8x32xf32>
    %cst = arith.constant dense<0.000000e+00> : vector<8xf32>
    %42 = vector.multi_reduction <add>, %41, %cst [1] : vector<8x32xf32> to vector<8xf32>
    %43 = vector.shape_cast %42 : vector<8xf32> to vector<8x1xf32>
    %44 = math.sqrt %43 : vector<8x1xf32>
    %cst_34 = arith.constant 1.000000e+00 : f32
    %45 = vector.broadcast %cst_34 : f32 to vector<8x1xf32>
    %46 = arith.cmpf ogt, %44, %45 : vector<8x1xf32>
    %cst_35 = arith.constant 1.000000e-07 : f32
    %47 = vector.broadcast %cst_35 : f32 to vector<8x1xf32>
    %48 = arith.addf %44, %47 : vector<8x1xf32>
    %cst_36 = arith.constant 1.000000e+00 : f32
    %49 = vector.broadcast %cst_36 : f32 to vector<8x1xf32>
    %50 = arith.divf %49, %48 : vector<8x1xf32>
    %cst_37 = arith.constant 1.000000e+00 : f32
    %51 = vector.broadcast %cst_37 : f32 to vector<8x1xf32>
    %52 = arith.select %46, %50, %51 : vector<8x1xi1>, vector<8x1xf32>
    %53 = vector.broadcast %52 : vector<8x1xf32> to vector<8x32xf32>
    %54 = arith.mulf %40, %53 : vector<8x32xf32>
    %c0_38 = arith.constant 0 : index
    %c0_39 = arith.constant 0 : index
    %55 = vector.load %arg2[%c0_38, %c0_39] : memref<32x32xf32, #tpu.memory_space<vmem>>, vector<32x32xf32>
    %cst_40 = arith.constant dense<0.000000e+00> : vector<8x32xf32>
    %56 = tpu.matmul %54, %55, %cst_40 {dimension_numbers = #tpu.dot_dimension_numbers<[1], [0], [0], [1], [0, 0, 1, 1], [], []>} : vector<8x32xf32>, vector<32x32xf32>, vector<8x32xf32> -> vector<8x32xf32>
    %c0_41 = arith.constant 0 : index
    %c0_42 = arith.constant 0 : index
    %57 = vector.load %arg3[%c0_41, %c0_42] : memref<1x32xf32, #tpu.memory_space<vmem>>, vector<1x32xf32>
    %58 = vector.broadcast %57 : vector<1x32xf32> to vector<8x32xf32>
    %59 = arith.addf %56, %58 : vector<8x32xf32>
    %c0_43 = arith.constant 0 : index
    %c0_44 = arith.constant 0 : index
    %60 = vector.load %arg4[%c0_43, %c0_44] : memref<32x32xf32, #tpu.memory_space<vmem>>, vector<32x32xf32>
    %cst_45 = arith.constant 0.000000e+00 : f32
    %61 = vector.broadcast %cst_45 : f32 to vector<1x32xf32>
    %62 = vector.extract_strided_slice %59 {offsets = [0, 0], sizes = [1, 32], strides = [1, 1]} : vector<8x32xf32> to vector<1x32xf32>
    %cst_46 = arith.constant dense<0.000000e+00> : vector<1x32xf32>
    %63 = tpu.matmul %61, %60, %cst_46 {dimension_numbers = #tpu.dot_dimension_numbers<[1], [0], [0], [1], [0, 0, 1, 1], [], []>} : vector<1x32xf32>, vector<32x32xf32>, vector<1x32xf32> -> vector<1x32xf32>
    %64 = arith.addf %62, %63 : vector<1x32xf32>
    %65 = math.tanh %64 : vector<1x32xf32>
    %66 = vector.extract_strided_slice %59 {offsets = [1, 0], sizes = [1, 32], strides = [1, 1]} : vector<8x32xf32> to vector<1x32xf32>
    %cst_47 = arith.constant dense<0.000000e+00> : vector<1x32xf32>
    %67 = tpu.matmul %65, %60, %cst_47 {dimension_numbers = #tpu.dot_dimension_numbers<[1], [0], [0], [1], [0, 0, 1, 1], [], []>} : vector<1x32xf32>, vector<32x32xf32>, vector<1x32xf32> -> vector<1x32xf32>
    %68 = arith.addf %66, %67 : vector<1x32xf32>
    %69 = math.tanh %68 : vector<1x32xf32>
    %70 = vector.extract_strided_slice %59 {offsets = [2, 0], sizes = [1, 32], strides = [1, 1]} : vector<8x32xf32> to vector<1x32xf32>
    %cst_48 = arith.constant dense<0.000000e+00> : vector<1x32xf32>
    %71 = tpu.matmul %69, %60, %cst_48 {dimension_numbers = #tpu.dot_dimension_numbers<[1], [0], [0], [1], [0, 0, 1, 1], [], []>} : vector<1x32xf32>, vector<32x32xf32>, vector<1x32xf32> -> vector<1x32xf32>
    %72 = arith.addf %70, %71 : vector<1x32xf32>
    %73 = math.tanh %72 : vector<1x32xf32>
    %74 = vector.extract_strided_slice %59 {offsets = [3, 0], sizes = [1, 32], strides = [1, 1]} : vector<8x32xf32> to vector<1x32xf32>
    %cst_49 = arith.constant dense<0.000000e+00> : vector<1x32xf32>
    %75 = tpu.matmul %73, %60, %cst_49 {dimension_numbers = #tpu.dot_dimension_numbers<[1], [0], [0], [1], [0, 0, 1, 1], [], []>} : vector<1x32xf32>, vector<32x32xf32>, vector<1x32xf32> -> vector<1x32xf32>
    %76 = arith.addf %74, %75 : vector<1x32xf32>
    %77 = math.tanh %76 : vector<1x32xf32>
    %78 = vector.extract_strided_slice %59 {offsets = [4, 0], sizes = [1, 32], strides = [1, 1]} : vector<8x32xf32> to vector<1x32xf32>
    %cst_50 = arith.constant dense<0.000000e+00> : vector<1x32xf32>
    %79 = tpu.matmul %77, %60, %cst_50 {dimension_numbers = #tpu.dot_dimension_numbers<[1], [0], [0], [1], [0, 0, 1, 1], [], []>} : vector<1x32xf32>, vector<32x32xf32>, vector<1x32xf32> -> vector<1x32xf32>
    %80 = arith.addf %78, %79 : vector<1x32xf32>
    %81 = math.tanh %80 : vector<1x32xf32>
    %82 = vector.extract_strided_slice %59 {offsets = [5, 0], sizes = [1, 32], strides = [1, 1]} : vector<8x32xf32> to vector<1x32xf32>
    %cst_51 = arith.constant dense<0.000000e+00> : vector<1x32xf32>
    %83 = tpu.matmul %81, %60, %cst_51 {dimension_numbers = #tpu.dot_dimension_numbers<[1], [0], [0], [1], [0, 0, 1, 1], [], []>} : vector<1x32xf32>, vector<32x32xf32>, vector<1x32xf32> -> vector<1x32xf32>
    %84 = arith.addf %82, %83 : vector<1x32xf32>
    %85 = math.tanh %84 : vector<1x32xf32>
    %86 = vector.extract_strided_slice %59 {offsets = [6, 0], sizes = [1, 32], strides = [1, 1]} : vector<8x32xf32> to vector<1x32xf32>
    %cst_52 = arith.constant dense<0.000000e+00> : vector<1x32xf32>
    %87 = tpu.matmul %85, %60, %cst_52 {dimension_numbers = #tpu.dot_dimension_numbers<[1], [0], [0], [1], [0, 0, 1, 1], [], []>} : vector<1x32xf32>, vector<32x32xf32>, vector<1x32xf32> -> vector<1x32xf32>
    %88 = arith.addf %86, %87 : vector<1x32xf32>
    %89 = math.tanh %88 : vector<1x32xf32>
    %90 = vector.extract_strided_slice %59 {offsets = [7, 0], sizes = [1, 32], strides = [1, 1]} : vector<8x32xf32> to vector<1x32xf32>
    %cst_53 = arith.constant dense<0.000000e+00> : vector<1x32xf32>
    %91 = tpu.matmul %89, %60, %cst_53 {dimension_numbers = #tpu.dot_dimension_numbers<[1], [0], [0], [1], [0, 0, 1, 1], [], []>} : vector<1x32xf32>, vector<32x32xf32>, vector<1x32xf32> -> vector<1x32xf32>
    %92 = arith.addf %90, %91 : vector<1x32xf32>
    %93 = math.tanh %92 : vector<1x32xf32>
    %c0_54 = arith.constant 0 : index
    %c0_55 = arith.constant 0 : index
    %94 = vector.load %arg5[%c0_54, %c0_55] : memref<32x8xf32, #tpu.memory_space<vmem>>, vector<32x8xf32>
    %cst_56 = arith.constant dense<0.000000e+00> : vector<1x8xf32>
    %95 = tpu.matmul %93, %94, %cst_56 {dimension_numbers = #tpu.dot_dimension_numbers<[1], [0], [0], [1], [0, 0, 1, 1], [], []>} : vector<1x32xf32>, vector<32x8xf32>, vector<1x8xf32> -> vector<1x8xf32>
    %c0_57 = arith.constant 0 : index
    %c0_58 = arith.constant 0 : index
    %96 = vector.load %arg6[%c0_57, %c0_58] : memref<1x8xf32, #tpu.memory_space<vmem>>, vector<1x8xf32>
    %97 = arith.addf %95, %96 : vector<1x8xf32>
    %cst_59 = arith.constant dense<0xFF800000> : vector<1xf32>
    %98 = vector.multi_reduction <maximumf>, %97, %cst_59 [1] : vector<1x8xf32> to vector<1xf32>
    %99 = vector.shape_cast %98 : vector<1xf32> to vector<1x1xf32>
    %100 = vector.broadcast %99 : vector<1x1xf32> to vector<1x8xf32>
    %101 = arith.subf %97, %100 : vector<1x8xf32>
    %102 = math.exp %101 : vector<1x8xf32>
    %cst_60 = arith.constant dense<0.000000e+00> : vector<1xf32>
    %103 = vector.multi_reduction <add>, %102, %cst_60 [1] : vector<1x8xf32> to vector<1xf32>
    %104 = vector.shape_cast %103 : vector<1xf32> to vector<1x1xf32>
    %105 = math.log %104 : vector<1x1xf32>
    %106 = vector.broadcast %105 : vector<1x1xf32> to vector<1x8xf32>
    %107 = arith.subf %101, %106 : vector<1x8xf32>
    %c0_61 = arith.constant 0 : index
    %c0_62 = arith.constant 0 : index
    %108 = vector.load %arg7[%c0_61, %c0_62] : memref<1x8xf32, #tpu.memory_space<vmem>>, vector<1x8xf32>
    tpu.vector_store %arg7[%c0_61, %c0_62], %107 {strides = array<i32>} : memref<1x8xf32, #tpu.memory_space<vmem>>, vector<1x8xf32>,
    return
  }
}

</mosaic_0001>

<llo_original>
// kernel: tpu_custom_call.1
$region0: #{tpu_custom_call.1}
  #allocation0 [shape = 'u32[]', space=smem, size = 0x4, offset = 0x4, fixed_abs, tag = 'smem constant byte address 0x4 - core index']
  #allocation1 [shape = 'u32[144,128]{1,0:T(1,128)}', space=vmem, size = 0x12000, scoped, tag = 'internal scratch']
  #allocation2 [shape = 'f32[8,32]{1,0:T(8,128)}', space=vmem, size = 0x1000, scoped, tag = 'scratch operand']
  %s0 = inlined_call_operand.vmem [shape: s32[8], index: 0, kind: input, shape index: {}]
  %s1 = inlined_call_operand.vmem [shape: f32[50,1,32], index: 1, kind: input, shape index: {}]
  %s2 = inlined_call_operand.vmem [shape: f32[32,32], index: 2, kind: input, shape index: {}]
  %s3 = inlined_call_operand.vmem [shape: f32[1,32], index: 3, kind: input, shape index: {}]
  %s4 = inlined_call_operand.vmem [shape: f32[32,32], index: 4, kind: input, shape index: {}]
  %s5 = inlined_call_operand.vmem [shape: f32[32,8], index: 5, kind: input, shape index: {}]
  %s6 = inlined_call_operand.vmem [shape: f32[1,8], index: 6, kind: input, shape index: {}]
  %s7 = inlined_call_operand.hbm [shape: f32[1,8], index: 7, kind: output, shape index: {}]
  %s8 = sld [smem:[#allocation0]]
  $region42: #{tpu_custom_call.1} parent=0
    _
  %s10 = ssub.s32 1, %s8
  %s11 = scalar_select 0, %s10, %s8
  $region1: #{tpu_custom_call.1} parent=0
    #allocation3 [shape = 'u8[512]{0}', space=smem, size = 0x200, scoped, tag = 'input window, operand 0, single buffered']
    #allocation4 [shape = 's32[1]{0}', space=sflag, size = 0x4, scoped, tag = 'scoped memory for tpu_custom_call.1']
    #allocation5 [shape = 's32[1]{0}', space=sflag, size = 0x4, scoped, tag = 'scoped memory for tpu_custom_call.1']
    #allocation6 [shape = 'u8[512]{0}', space=vmem, size = 0x400, scoped, tag = 'output window, operand 0, single buffered']
    %12 = vsyncpa [#allocation5], 0
    %13 = vsyncpa [#allocation4], 0
    // Predicated region
    $region2: #{tpu_custom_call.1} parent=1 // pred_check
      _
    $region3: #{tpu_custom_call.1} parent=1 // pred_check_branch
      %15 = sbr.rel (0) target = $region5
    $region4: #{tpu_custom_call.1} parent=1 // pred_region
      %s17 = ssub.s32 16, 16
      %18 = vsyncadd [#allocation5], %s17
      %s20 = sshll.u32 %s0, 4
      %s21 = int_to_ptr.vmem [resolvable:$true] %s20
      %23 = dma.vmem_to_smem %s21, 16, [#allocation3], [#allocation5]
    $region5: #{tpu_custom_call.1} parent=1 // pred_fallthru
      _
    // Predicated region
    $region6: #{tpu_custom_call.1} parent=1 // pred_check
      _
    $region7: #{tpu_custom_call.1} parent=1 // pred_check_branch
      %25 = sbr.rel (0) target = $region9
    $region8: #{tpu_custom_call.1} parent=1 // pred_region
      _
    $region9: #{tpu_custom_call.1} parent=1 // pred_fallthru
      _
    // Predicated region
    $region10: #{tpu_custom_call.1} parent=1 // pred_check
      _
    $region11: #{tpu_custom_call.1} parent=1 // pred_check_branch
      %27 = sbr.rel (0) target = $region13
    $region12: #{tpu_custom_call.1} parent=1 // pred_region
      _
    $region13: #{tpu_custom_call.1} parent=1 // pred_fallthru
      _
    // Predicated region
    $region14: #{tpu_custom_call.1} parent=1 // pred_check
      _
    $region15: #{tpu_custom_call.1} parent=1 // pred_check_branch
      %29 = sbr.rel (0) target = $region17
    $region16: #{tpu_custom_call.1} parent=1 // pred_region
      _
    $region17: #{tpu_custom_call.1} parent=1 // pred_fallthru
      _
    // Predicated region
    $region18: #{tpu_custom_call.1} parent=1 // pred_check
      _
    $region19: #{tpu_custom_call.1} parent=1 // pred_check_branch
      %31 = sbr.rel (0) target = $region21
    $region20: #{tpu_custom_call.1} parent=1 // pred_region
      _
    $region21: #{tpu_custom_call.1} parent=1 // pred_fallthru
      _
    // Predicated region
    $region22: #{tpu_custom_call.1} parent=1 // pred_check
      _
    $region23: #{tpu_custom_call.1} parent=1 // pred_check_branch
      %33 = sbr.rel (0) target = $region25
    $region24: #{tpu_custom_call.1} parent=1 // pred_region
      _
    $region25: #{tpu_custom_call.1} parent=1 // pred_fallthru
      _
    // Predicated region
    $region26: #{tpu_custom_call.1} parent=1 // pred_check
      _
    $region27: #{tpu_custom_call.1} parent=1 // pred_check_branch
      %35 = sbr.rel (0) target = $region29
    $region28: #{tpu_custom_call.1} parent=1 // pred_region
      _
    $region29: #{tpu_custom_call.1} parent=1 // pred_fallthru
      _
    // Predicated region
    $region30: #{tpu_custom_call.1} parent=1 // pred_check
      _
    $region31: #{tpu_custom_call.1} parent=1 // pred_check_branch
      %37 = sbr.rel (0) target = $region33
    $region32: #{tpu_custom_call.1} parent=1 // pred_region
      %38 = dma.done [#allocation5], 16
    $region33: #{tpu_custom_call.1} parent=1 // pred_fallthru
      _
    %39 = sfence
    %s40 = sld [smem:[#allocation3]]
    %s41 = scalar_lea.vmem %s1, %s40
    %v42 = vld [vmem:[%s41] sm:$0x1]
    %vm43 = vcmask 253952
    %44 = vst.msk [vmem:[#allocation2] sm:$0x1] %vm43, %v42
    %s45 = sld [smem:[#allocation3 + $0x1]]
    %s46 = scalar_lea.vmem %s1, %s45
    %v47 = vld [vmem:[%s46] sm:$0x1]
    %48 = vst.msk [vmem:[#allocation2 + $0x1] sm:$0x1] %vm43, %v47
    %s49 = sld [smem:[#allocation3 + $0x2]]
    %s50 = scalar_lea.vmem %s1, %s49
    %v51 = vld [vmem:[%s50] sm:$0x1]
    %52 = vst.msk [vmem:[#allocation2 + $0x2] sm:$0x1] %vm43, %v51
    %s53 = sld [smem:[#allocation3 + $0x3]]
    %s54 = scalar_lea.vmem %s1, %s53
    %v55 = vld [vmem:[%s54] sm:$0x1]
    %56 = vst.msk [vmem:[#allocation2 + $0x3] sm:$0x1] %vm43, %v55
    %s57 = sld [smem:[#allocation3 + $0x4]]
    %s58 = scalar_lea.vmem %s1, %s57
    %v59 = vld [vmem:[%s58] sm:$0x1]
    %60 = vst.msk [vmem:[#allocation2 + $0x4] sm:$0x1] %vm43, %v59
    %s61 = sld [smem:[#allocation3 + $0x5]]
    %s62 = scalar_lea.vmem %s1, %s61
    %v63 = vld [vmem:[%s62] sm:$0x1]
    %64 = vst.msk [vmem:[#allocation2 + $0x5] sm:$0x1] %vm43, %v63
    %s65 = sld [smem:[#allocation3 + $0x6]]
    %s66 = scalar_lea.vmem %s1, %s65
    %v67 = vld [vmem:[%s66] sm:$0x1]
    %68 = vst.msk [vmem:[#allocation2 + $0x6] sm:$0x1] %vm43, %v67
    %s69 = sld [smem:[#allocation3 + $0x7]]
    %s70 = scalar_lea.vmem %s1, %s69
    %v71 = vld [vmem:[%s70] sm:$0x1]
    %72 = vst.msk [vmem:[#allocation2 + $0x7] sm:$0x1] %vm43, %v71
    %v73 = vld [vmem:[#allocation2] sm:$0xff]
    %v74 = vmul.f32 %v73, %v73
    %vm75 = vcmask 261120
    %v76 = vsel %vm75, %v74, 0.0
    %77 = vadd.xlane.f32.xlu0 %v76
    %v78 = vpop.xlane.xlu0 %77
    %v79 = vrsqrt.pop %v78
    %v80 = vmul.f32 %v78, %v79
    %vm81 = vcmp.eq.f32.partialorder %v78, inf
    %v82 = vsel %vm81, %v78, %v80
    %vm83 = vcmp.eq.f32.partialorder %v78, 0.0
    %v84 = vand.u32 %v78, 2147483648
    %v85 = vsel %vm83, %v84, %v82
    %vm86 = vcmp.gt.f32.partialorder %v85, 1.0
    %v87 = vadd.f32 %v85, 1e-07
    %v88 = vrcp.pop %v87
    %v89 = vmul.f32 1.0, %v88
    %v90 = vsel %vm86, %v89, 1.0
    %v91 = vmul.f32 %v73, %v90
    %v92 = vld [vmem:[%s2] sm:$0xff]
    %v93 = vld [vmem:[%s2 + $0x8] sm:$0xff]
    %v94 = vld [vmem:[%s2 + $0x10] sm:$0xff]
    %v95 = vld [vmem:[%s2 + $0x18] sm:$0xff]
    %v96 = vld [vmem:[%s3] sm:$0x1]
    %v98 = vlaneseq
    %v99 = vshrl.u32 %v98, 7
    %v100 = vsub.s32 0, %v99
    %v101 = vrot.slane %v96, %v100
    %v104 = vsel %vm75, %v91, 0
    %106 = vmatprep.subr.mxu0 0.0
    %107 = vmatpush1.msra.mxu0 %v92
    %108 = vmatprep.subr.mxu0 0.0
    %109 = vmatpush1.msra.mxu0 %v93
    %110 = vmatprep.subr.mxu0 0.0
    %111 = vmatpush1.msra.mxu0 %v94
    %112 = vmatprep.subr.mxu0 0.0
    %113 = vmatpush1.msra.mxu0 %v95
    %114 = vmatprep.subr.mxu0 0.0
    %115 = vmatpush1.msra.mxu0 0.0
    %116 = vmatprep.subr.mxu0 0.0
    %117 = vmatpush1.msra.mxu0 0.0
    %118 = vmatprep.subr.mxu0 0.0
    %119 = vmatpush1.msra.mxu0 0.0
    %120 = vmatprep.subr.mxu0 0.0
    %121 = vmatpush1.msra.mxu0 0.0
    %122 = vmatprep.subr.mxu0 0.0
    %123 = vmatpush1.msra.mxu0 0.0
    %124 = vmatprep.subr.mxu0 0.0
    %125 = vmatpush1.msra.mxu0 0.0
    %126 = vmatprep.subr.mxu0 0.0
    %127 = vmatpush1.msra.mxu0 0.0
    %128 = vmatprep.subr.mxu0 0.0
    %129 = vmatpush1.msra.mxu0 0.0
    %130 = vmatprep.subr.mxu0 0.0
    %131 = vmatpush1.msra.mxu0 0.0
    %132 = vmatprep.subr.mxu0 0.0
    %133 = vmatpush1.msra.mxu0 0.0
    %134 = vmatprep.subr.mxu0 0.0
    %135 = vmatpush1.msra.mxu0 0.0
    %136 = vmatprep.subr.mxu0 0.0
    %137 = vmatpush1.msra.mxu0 0.0
    %138 = vmatprep.subr.mxu0 0.0
    %139 = vmatpush1.msra.mxu0 0.0
    %140 = vmatprep.subr.mxu0 0.0
    %141 = vmatpush1.msra.mxu0 0.0
    %142 = vmatprep.subr.mxu0 0.0
    %143 = vmatpush1.msra.mxu0 0.0
    %144 = vmatprep.subr.mxu0 0.0
    %145 = vmatpush1.msra.mxu0 0.0
    %146 = vmatprep.subr.mxu0 0.0
    %147 = vmatpush1.msra.mxu0 0.0
    %148 = vmatprep.subr.mxu0 0.0
    %149 = vmatpush1.msra.mxu0 0.0
    %150 = vmatprep.subr.mxu0 0.0
    %151 = vmatpush1.msra.mxu0 0.0
    %152 = vmatprep.subr.mxu0 0.0
    %153 = vmatpush1.msra.mxu0 0.0
    %154 = vmatprep.subr.mxu0 0.0
    %155 = vmatpush1.msra.mxu0 0.0
    %156 = vmatprep.subr.mxu0 0.0
    %157 = vmatpush1.msra.mxu0 0.0
    %158 = vmatprep.subr.mxu0 0.0
    %159 = vmatpush1.msra.mxu0 0.0
    %160 = vmatprep.subr.mxu0 0.0
    %161 = vmatpush1.msra.mxu0 0.0
    %162 = vmatprep.subr.mxu0 0.0
    %163 = vmatpush1.msra.mxu0 0.0
    %164 = vmatprep.subr.mxu0 0.0
    %165 = vmatpush1.msra.mxu0 0.0
    %166 = vmatprep.subr.mxu0 0.0
    %167 = vmatpush1.msra.mxu0 0.0
    %168 = vmatprep.subr.mxu0 0.0
    %169 = vmatpush1.msra.mxu0 0.0
    %170 = vmatprep.mubr.f32.mxu0 0.0
    %171 = vmatmul.mubr.f32.gmra.mrb[0].mxu0 %v104
    %v172 = vpop.f32.mrb[0].mxu0
    %v173 = vadd.f32 %v101, %v172
    %v174 = vpop.f32.mrb[0].mxu0
    %175 = vdwg.mxu0
    %v176 = vld [vmem:[%s4] sm:$0xff]
    %v177 = vld [vmem:[%s4 + $0x8] sm:$0xff]
    %v178 = vld [vmem:[%s4 + $0x10] sm:$0xff]
    %v179 = vld [vmem:[%s4 + $0x18] sm:$0xff]
    %v181 = vsel %vm75, 0.0, 0
    %183 = vmatprep.subr.mxu0 0.0
    %184 = vmatpush1.msra.mxu0 %v176
    %185 = vmatprep.subr.mxu0 0.0
    %186 = vmatpush1.msra.mxu0 %v177
    %187 = vmatprep.subr.mxu0 0.0
    %188 = vmatpush1.msra.mxu0 %v178
    %189 = vmatprep.subr.mxu0 0.0
    %190 = vmatpush1.msra.mxu0 %v179
    %191 = vmatprep.subr.mxu0 0.0
    %192 = vmatpush1.msra.mxu0 0.0
    %193 = vmatprep.subr.mxu0 0.0
    %194 = vmatpush1.msra.mxu0 0.0
    %195 = vmatprep.subr.mxu0 0.0
    %196 = vmatpush1.msra.mxu0 0.0
    %197 = vmatprep.subr.mxu0 0.0
    %198 = vmatpush1.msra.mxu0 0.0
    %199 = vmatprep.subr.mxu0 0.0
    %200 = vmatpush1.msra.mxu0 0.0
    %201 = vmatprep.subr.mxu0 0.0
    %202 = vmatpush1.msra.mxu0 0.0
    %203 = vmatprep.subr.mxu0 0.0
    %204 = vmatpush1.msra.mxu0 0.0
    %205 = vmatprep.subr.mxu0 0.0
    %206 = vmatpush1.msra.mxu0 0.0
    %207 = vmatprep.subr.mxu0 0.0
    %208 = vmatpush1.msra.mxu0 0.0
    %209 = vmatprep.subr.mxu0 0.0
    %210 = vmatpush1.msra.mxu0 0.0
    %211 = vmatprep.subr.mxu0 0.0
    %212 = vmatpush1.msra.mxu0 0.0
    %213 = vmatprep.subr.mxu0 0.0
    %214 = vmatpush1.msra.mxu0 0.0
    %215 = vmatprep.subr.mxu0 0.0
    %216 = vmatpush1.msra.mxu0 0.0
    %217 = vmatprep.subr.mxu0 0.0
    %218 = vmatpush1.msra.mxu0 0.0
    %219 = vmatprep.subr.mxu0 0.0
    %220 = vmatpush1.msra.mxu0 0.0
    %221 = vmatprep.subr.mxu0 0.0
    %222 = vmatpush1.msra.mxu0 0.0
    %223 = vmatprep.subr.mxu0 0.0
    %224 = vmatpush1.msra.mxu0 0.0
    %225 = vmatprep.subr.mxu0 0.0
    %226 = vmatpush1.msra.mxu0 0.0
    %227 = vmatprep.subr.mxu0 0.0
    %228 = vmatpush1.msra.mxu0 0.0
    %229 = vmatprep.subr.mxu0 0.0
    %230 = vmatpush1.msra.mxu0 0.0
    %231 = vmatprep.subr.mxu0 0.0
    %232 = vmatpush1.msra.mxu0 0.0
    %233 = vmatprep.subr.mxu0 0.0
    %234 = vmatpush1.msra.mxu0 0.0
    %235 = vmatprep.subr.mxu0 0.0
    %236 = vmatpush1.msra.mxu0 0.0
    %237 = vmatprep.subr.mxu0 0.0
    %238 = vmatpush1.msra.mxu0 0.0
    %239 = vmatprep.subr.mxu0 0.0
    %240 = vmatpush1.msra.mxu0 0.0
    %241 = vmatprep.subr.mxu0 0.0
    %242 = vmatpush1.msra.mxu0 0.0
    %243 = vmatprep.subr.mxu0 0.0
    %244 = vmatpush1.msra.mxu0 0.0
    %245 = vmatprep.subr.mxu0 0.0
    %246 = vmatpush1.msra.mxu0 0.0
    %247 = vmatprep.mubr.f32.mxu0 0.0
    %248 = vmatmul.mubr.f32.gmra.mrb[0].mxu0 %v181
    %v249 = vpop.f32.mrb[0].mxu0
    %v250 = vadd.f32 0.0, %v249
    %v251 = vpop.f32.mrb[0].mxu0
    %252 = vdwg.mxu0
    %v253 = vadd.f32 %v173, %v250
    %v254 = vtanh.pop %v253
    %v256 = vsel %vm75, %v254, 0
    %258 = vmatprep.subr.mxu0 0.0
    %259 = vmatpush1.msra.mxu0 %v176
    %260 = vmatprep.subr.mxu0 0.0
    %261 = vmatpush1.msra.mxu0 %v177
    %262 = vmatprep.subr.mxu0 0.0
    %263 = vmatpush1.msra.mxu0 %v178
    %264 = vmatprep.subr.mxu0 0.0
    %265 = vmatpush1.msra.mxu0 %v179
    %266 = vmatprep.subr.mxu0 0.0
    %267 = vmatpush1.msra.mxu0 0.0
    %268 = vmatprep.subr.mxu0 0.0
    %269 = vmatpush1.msra.mxu0 0.0
    %270 = vmatprep.subr.mxu0 0.0
    %271 = vmatpush1.msra.mxu0 0.0
    %272 = vmatprep.subr.mxu0 0.0
    %273 = vmatpush1.msra.mxu0 0.0
    %274 = vmatprep.subr.mxu0 0.0
    %275 = vmatpush1.msra.mxu0 0.0
    %276 = vmatprep.subr.mxu0 0.0
    %277 = vmatpush1.msra.mxu0 0.0
    %278 = vmatprep.subr.mxu0 0.0
    %279 = vmatpush1.msra.mxu0 0.0
    %280 = vmatprep.subr.mxu0 0.0
    %281 = vmatpush1.msra.mxu0 0.0
    %282 = vmatprep.subr.mxu0 0.0
    %283 = vmatpush1.msra.mxu0 0.0
    %284 = vmatprep.subr.mxu0 0.0
    %285 = vmatpush1.msra.mxu0 0.0
    %286 = vmatprep.subr.mxu0 0.0
    %287 = vmatpush1.msra.mxu0 0.0
    %288 = vmatprep.subr.mxu0 0.0
    %289 = vmatpush1.msra.mxu0 0.0
    %290 = vmatprep.subr.mxu0 0.0
    %291 = vmatpush1.msra.mxu0 0.0
    %292 = vmatprep.subr.mxu0 0.0
    %293 = vmatpush1.msra.mxu0 0.0
    %294 = vmatprep.subr.mxu0 0.0
    %295 = vmatpush1.msra.mxu0 0.0
    %296 = vmatprep.subr.mxu0 0.0
    %297 = vmatpush1.msra.mxu0 0.0
    %298 = vmatprep.subr.mxu0 0.0
    %299 = vmatpush1.msra.mxu0 0.0
    %300 = vmatprep.subr.mxu0 0.0
    %301 = vmatpush1.msra.mxu0 0.0
    %302 = vmatprep.subr.mxu0 0.0
    %303 = vmatpush1.msra.mxu0 0.0
    %304 = vmatprep.subr.mxu0 0.0
    %305 = vmatpush1.msra.mxu0 0.0
    %306 = vmatprep.subr.mxu0 0.0
    %307 = vmatpush1.msra.mxu0 0.0
    %308 = vmatprep.subr.mxu0 0.0
    %309 = vmatpush1.msra.mxu0 0.0
    %310 = vmatprep.subr.mxu0 0.0
    %311 = vmatpush1.msra.mxu0 0.0
    %312 = vmatprep.subr.mxu0 0.0
    %313 = vmatpush1.msra.mxu0 0.0
    %314 = vmatprep.subr.mxu0 0.0
    %315 = vmatpush1.msra.mxu0 0.0
    %316 = vmatprep.subr.mxu0 0.0
    %317 = vmatpush1.msra.mxu0 0.0
    %318 = vmatprep.subr.mxu0 0.0
    %319 = vmatpush1.msra.mxu0 0.0
    %320 = vmatprep.subr.mxu0 0.0
    %321 = vmatpush1.msra.mxu0 0.0
    %322 = vmatprep.mubr.f32.mxu0 0.0
    %323 = vmatmul.mubr.f32.gmra.mrb[0].mxu0 %v256
    %v324 = vpop.f32.mrb[0].mxu0
    %v325 = vadd.f32 0.0, %v324
    %v326 = vpop.f32.mrb[0].mxu0
    %327 = vdwg.mxu0
    %v329 = vrot.slane %v325, 7
    %v331 = vadd.f32 %v173, %v329
    %v332 = vtanh.pop %v331
    %v334 = vrot.slane %v332, 1
    %v335 = vsel %vm75, %v334, 0
    %337 = vmatprep.subr.mxu0 0.0
    %338 = vmatpush1.msra.mxu0 %v176
    %339 = vmatprep.subr.mxu0 0.0
    %340 = vmatpush1.msra.mxu0 %v177
    %341 = vmatprep.subr.mxu0 0.0
    %342 = vmatpush1.msra.mxu0 %v178
    %343 = vmatprep.subr.mxu0 0.0
    %344 = vmatpush1.msra.mxu0 %v179
    %345 = vmatprep.subr.mxu0 0.0
    %346 = vmatpush1.msra.mxu0 0.0
    %347 = vmatprep.subr.mxu0 0.0
    %348 = vmatpush1.msra.mxu0 0.0
    %349 = vmatprep.subr.mxu0 0.0
    %350 = vmatpush1.msra.mxu0 0.0
    %351 = vmatprep.subr.mxu0 0.0
    %352 = vmatpush1.msra.mxu0 0.0
    %353 = vmatprep.subr.mxu0 0.0
    %354 = vmatpush1.msra.mxu0 0.0
    %355 = vmatprep.subr.mxu0 0.0
    %356 = vmatpush1.msra.mxu0 0.0
    %357 = vmatprep.subr.mxu0 0.0
    %358 = vmatpush1.msra.mxu0 0.0
    %359 = vmatprep.subr.mxu0 0.0
    %360 = vmatpush1.msra.mxu0 0.0
    %361 = vmatprep.subr.mxu0 0.0
    %362 = vmatpush1.msra.mxu0 0.0
    %363 = vmatprep.subr.mxu0 0.0
    %364 = vmatpush1.msra.mxu0 0.0
    %365 = vmatprep.subr.mxu0 0.0
    %366 = vmatpush1.msra.mxu0 0.0
    %367 = vmatprep.subr.mxu0 0.0
    %368 = vmatpush1.msra.mxu0 0.0
    %369 = vmatprep.subr.mxu0 0.0
    %370 = vmatpush1.msra.mxu0 0.0
    %371 = vmatprep.subr.mxu0 0.0
    %372 = vmatpush1.msra.mxu0 0.0
    %373 = vmatprep.subr.mxu0 0.0
    %374 = vmatpush1.msra.mxu0 0.0
    %375 = vmatprep.subr.mxu0 0.0
    %376 = vmatpush1.msra.mxu0 0.0
    %377 = vmatprep.subr.mxu0 0.0
    %378 = vmatpush1.msra.mxu0 0.0
    %379 = vmatprep.subr.mxu0 0.0
    %380 = vmatpush1.msra.mxu0 0.0
    %381 = vmatprep.subr.mxu0 0.0
    %382 = vmatpush1.msra.mxu0 0.0
    %383 = vmatprep.subr.mxu0 0.0
    %384 = vmatpush1.msra.mxu0 0.0
    %385 = vmatprep.subr.mxu0 0.0
    %386 = vmatpush1.msra.mxu0 0.0
    %387 = vmatprep.subr.mxu0 0.0
    %388 = vmatpush1.msra.mxu0 0.0
    %389 = vmatprep.subr.mxu0 0.0
    %390 = vmatpush1.msra.mxu0 0.0
    %391 = vmatprep.subr.mxu0 0.0
    %392 = vmatpush1.msra.mxu0 0.0
    %393 = vmatprep.subr.mxu0 0.0
    %394 = vmatpush1.msra.mxu0 0.0
    %395 = vmatprep.subr.mxu0 0.0
    %396 = vmatpush1.msra.mxu0 0.0
    %397 = vmatprep.subr.mxu0 0.0
    %398 = vmatpush1.msra.mxu0 0.0
    %399 = vmatprep.subr.mxu0 0.0
    %400 = vmatpush1.msra.mxu0 0.0
    %401 = vmatprep.mubr.f32.mxu0 0.0
    %402 = vmatmul.mubr.f32.gmra.mrb[0].mxu0 %v335
    %v403 = vpop.f32.mrb[0].mxu0
    %v404 = vadd.f32 0.0, %v403
    %v405 = vpop.f32.mrb[0].mxu0
    %406 = vdwg.mxu0
    %v408 = vrot.slane %v404, 6
    %v410 = vadd.f32 %v173, %v408
    %v411 = vtanh.pop %v410
    %v413 = vrot.slane %v411, 2
    %v414 = vsel %vm75, %v413, 0
    %416 = vmatprep.subr.mxu0 0.0
    %417 = vmatpush1.msra.mxu0 %v176
    %418 = vmatprep.subr.mxu0 0.0
    %419 = vmatpush1.msra.mxu0 %v177
    %420 = vmatprep.subr.mxu0 0.0
    %421 = vmatpush1.msra.mxu0 %v178
    %422 = vmatprep.subr.mxu0 0.0
    %423 = vmatpush1.msra.mxu0 %v179
    %424 = vmatprep.subr.mxu0 0.0
    %425 = vmatpush1.msra.mxu0 0.0
    %426 = vmatprep.subr.mxu0 0.0
    %427 = vmatpush1.msra.mxu0 0.0
    %428 = vmatprep.subr.mxu0 0.0
    %429 = vmatpush1.msra.mxu0 0.0
    %430 = vmatprep.subr.mxu0 0.0
    %431 = vmatpush1.msra.mxu0 0.0
    %432 = vmatprep.subr.mxu0 0.0
    %433 = vmatpush1.msra.mxu0 0.0
    %434 = vmatprep.subr.mxu0 0.0
    %435 = vmatpush1.msra.mxu0 0.0
    %436 = vmatprep.subr.mxu0 0.0
    %437 = vmatpush1.msra.mxu0 0.0
    %438 = vmatprep.subr.mxu0 0.0
    %439 = vmatpush1.msra.mxu0 0.0
    %440 = vmatprep.subr.mxu0 0.0
    %441 = vmatpush1.msra.mxu0 0.0
    %442 = vmatprep.subr.mxu0 0.0
    %443 = vmatpush1.msra.mxu0 0.0
    %444 = vmatprep.subr.mxu0 0.0
    %445 = vmatpush1.msra.mxu0 0.0
    %446 = vmatprep.subr.mxu0 0.0
    %447 = vmatpush1.msra.mxu0 0.0
    %448 = vmatprep.subr.mxu0 0.0
    %449 = vmatpush1.msra.mxu0 0.0
    %450 = vmatprep.subr.mxu0 0.0
    %451 = vmatpush1.msra.mxu0 0.0
    %452 = vmatprep.subr.mxu0 0.0
    %453 = vmatpush1.msra.mxu0 0.0
    %454 = vmatprep.subr.mxu0 0.0
    %455 = vmatpush1.msra.mxu0 0.0
    %456 = vmatprep.subr.mxu0 0.0
    %457 = vmatpush1.msra.mxu0 0.0
    %458 = vmatprep.subr.mxu0 0.0
    %459 = vmatpush1.msra.mxu0 0.0
    %460 = vmatprep.subr.mxu0 0.0
    %461 = vmatpush1.msra.mxu0 0.0
    %462 = vmatprep.subr.mxu0 0.0
    %463 = vmatpush1.msra.mxu0 0.0
    %464 = vmatprep.subr.mxu0 0.0
    %465 = vmatpush1.msra.mxu0 0.0
    %466 = vmatprep.subr.mxu0 0.0
    %467 = vmatpush1.msra.mxu0 0.0
    %468 = vmatprep.subr.mxu0 0.0
    %469 = vmatpush1.msra.mxu0 0.0
    %470 = vmatprep.subr.mxu0 0.0
    %471 = vmatpush1.msra.mxu0 0.0
    %472 = vmatprep.subr.mxu0 0.0
    %473 = vmatpush1.msra.mxu0 0.0
    %474 = vmatprep.subr.mxu0 0.0
    %475 = vmatpush1.msra.mxu0 0.0
    %476 = vmatprep.subr.mxu0 0.0
    %477 = vmatpush1.msra.mxu0 0.0
    %478 = vmatprep.subr.mxu0 0.0
    %479 = vmatpush1.msra.mxu0 0.0
    %480 = vmatprep.mubr.f32.mxu0 0.0
    %481 = vmatmul.mubr.f32.gmra.mrb[0].mxu0 %v414
    %v482 = vpop.f32.mrb[0].mxu0
    %v483 = vadd.f32 0.0, %v482
    %v484 = vpop.f32.mrb[0].mxu0
    %485 = vdwg.mxu0
    %v487 = vrot.slane %v483, 5
    %v489 = vadd.f32 %v173, %v487
    %v490 = vtanh.pop %v489
    %v492 = vrot.slane %v490, 3
    %v493 = vsel %vm75, %v492, 0
    %495 = vmatprep.subr.mxu0 0.0
    %496 = vmatpush1.msra.mxu0 %v176
    %497 = vmatprep.subr.mxu0 0.0
    %498 = vmatpush1.msra.mxu0 %v177
    %499 = vmatprep.subr.mxu0 0.0
    %500 = vmatpush1.msra.mxu0 %v178
    %501 = vmatprep.subr.mxu0 0.0
    %502 = vmatpush1.msra.mxu0 %v179
    %503 = vmatprep.subr.mxu0 0.0
    %504 = vmatpush1.msra.mxu0 0.0
    %505 = vmatprep.subr.mxu0 0.0
    %506 = vmatpush1.msra.mxu0 0.0
    %507 = vmatprep.subr.mxu0 0.0
    %508 = vmatpush1.msra.mxu0 0.0
    %509 = vmatprep.subr.mxu0 0.0
    %510 = vmatpush1.msra.mxu0 0.0
    %511 = vmatprep.subr.mxu0 0.0
    %512 = vmatpush1.msra.mxu0 0.0
    %513 = vmatprep.subr.mxu0 0.0
    %514 = vmatpush1.msra.mxu0 0.0
    %515 = vmatprep.subr.mxu0 0.0
    %516 = vmatpush1.msra.mxu0 0.0
    %517 = vmatprep.subr.mxu0 0.0
    %518 = vmatpush1.msra.mxu0 0.0
    %519 = vmatprep.subr.mxu0 0.0
    %520 = vmatpush1.msra.mxu0 0.0
    %521 = vmatprep.subr.mxu0 0.0
    %522 = vmatpush1.msra.mxu0 0.0
    %523 = vmatprep.subr.mxu0 0.0
    %524 = vmatpush1.msra.mxu0 0.0
    %525 = vmatprep.subr.mxu0 0.0
    %526 = vmatpush1.msra.mxu0 0.0
    %527 = vmatprep.subr.mxu0 0.0
    %528 = vmatpush1.msra.mxu0 0.0
    %529 = vmatprep.subr.mxu0 0.0
    %530 = vmatpush1.msra.mxu0 0.0
    %531 = vmatprep.subr.mxu0 0.0
    %532 = vmatpush1.msra.mxu0 0.0
    %533 = vmatprep.subr.mxu0 0.0
    %534 = vmatpush1.msra.mxu0 0.0
    %535 = vmatprep.subr.mxu0 0.0
    %536 = vmatpush1.msra.mxu0 0.0
    %537 = vmatprep.subr.mxu0 0.0
    %538 = vmatpush1.msra.mxu0 0.0
    %539 = vmatprep.subr.mxu0 0.0
    %540 = vmatpush1.msra.mxu0 0.0
    %541 = vmatprep.subr.mxu0 0.0
    %542 = vmatpush1.msra.mxu0 0.0
    %543 = vmatprep.subr.mxu0 0.0
    %544 = vmatpush1.msra.mxu0 0.0
    %545 = vmatprep.subr.mxu0 0.0
    %546 = vmatpush1.msra.mxu0 0.0
    %547 = vmatprep.subr.mxu0 0.0
    %548 = vmatpush1.msra.mxu0 0.0
    %549 = vmatprep.subr.mxu0 0.0
    %550 = vmatpush1.msra.mxu0 0.0
    %551 = vmatprep.subr.mxu0 0.0
    %552 = vmatpush1.msra.mxu0 0.0
    %553 = vmatprep.subr.mxu0 0.0
    %554 = vmatpush1.msra.mxu0 0.0
    %555 = vmatprep.subr.mxu0 0.0
    %556 = vmatpush1.msra.mxu0 0.0
    %557 = vmatprep.subr.mxu0 0.0
    %558 = vmatpush1.msra.mxu0 0.0
    %559 = vmatprep.mubr.f32.mxu0 0.0
    %560 = vmatmul.mubr.f32.gmra.mrb[0].mxu0 %v493
    %v561 = vpop.f32.mrb[0].mxu0
    %v562 = vadd.f32 0.0, %v561
    %v563 = vpop.f32.mrb[0].mxu0
    %564 = vdwg.mxu0
    %v566 = vrot.slane %v562, 4
    %v568 = vadd.f32 %v173, %v566
    %v569 = vtanh.pop %v568
    %v571 = vrot.slane %v569, 4
    %v572 = vsel %vm75, %v571, 0
    %574 = vmatprep.subr.mxu0 0.0
    %575 = vmatpush1.msra.mxu0 %v176
    %576 = vmatprep.subr.mxu0 0.0
    %577 = vmatpush1.msra.mxu0 %v177
    %578 = vmatprep.subr.mxu0 0.0
    %579 = vmatpush1.msra.mxu0 %v178
    %580 = vmatprep.subr.mxu0 0.0
    %581 = vmatpush1.msra.mxu0 %v179
    %582 = vmatprep.subr.mxu0 0.0
    %583 = vmatpush1.msra.mxu0 0.0
    %584 = vmatprep.subr.mxu0 0.0
    %585 = vmatpush1.msra.mxu0 0.0
    %586 = vmatprep.subr.mxu0 0.0
    %587 = vmatpush1.msra.mxu0 0.0
    %588 = vmatprep.subr.mxu0 0.0
    %589 = vmatpush1.msra.mxu0 0.0
    %590 = vmatprep.subr.mxu0 0.0
    %591 = vmatpush1.msra.mxu0 0.0
    %592 = vmatprep.subr.mxu0 0.0
    %593 = vmatpush1.msra.mxu0 0.0
    %594 = vmatprep.subr.mxu0 0.0
    %595 = vmatpush1.msra.mxu0 0.0
    %596 = vmatprep.subr.mxu0 0.0
    %597 = vmatpush1.msra.mxu0 0.0
    %598 = vmatprep.subr.mxu0 0.0
    %599 = vmatpush1.msra.mxu0 0.0
    %600 = vmatprep.subr.mxu0 0.0
    %601 = vmatpush1.msra.mxu0 0.0
    %602 = vmatprep.subr.mxu0 0.0
    %603 = vmatpush1.msra.mxu0 0.0
    %604 = vmatprep.subr.mxu0 0.0
    %605 = vmatpush1.msra.mxu0 0.0
    %606 = vmatprep.subr.mxu0 0.0
    %607 = vmatpush1.msra.mxu0 0.0
    %608 = vmatprep.subr.mxu0 0.0
    %609 = vmatpush1.msra.mxu0 0.0
    %610 = vmatprep.subr.mxu0 0.0
    %611 = vmatpush1.msra.mxu0 0.0
    %612 = vmatprep.subr.mxu0 0.0
    %613 = vmatpush1.msra.mxu0 0.0
    %614 = vmatprep.subr.mxu0 0.0
    %615 = vmatpush1.msra.mxu0 0.0
    %616 = vmatprep.subr.mxu0 0.0
    %617 = vmatpush1.msra.mxu0 0.0
    %618 = vmatprep.subr.mxu0 0.0
    %619 = vmatpush1.msra.mxu0 0.0
    %620 = vmatprep.subr.mxu0 0.0
    %621 = vmatpush1.msra.mxu0 0.0
    %622 = vmatprep.subr.mxu0 0.0
    %623 = vmatpush1.msra.mxu0 0.0
    %624 = vmatprep.subr.mxu0 0.0
    %625 = vmatpush1.msra.mxu0 0.0
    %626 = vmatprep.subr.mxu0 0.0
    %627 = vmatpush1.msra.mxu0 0.0
    %628 = vmatprep.subr.mxu0 0.0
    %629 = vmatpush1.msra.mxu0 0.0
    %630 = vmatprep.subr.mxu0 0.0
    %631 = vmatpush1.msra.mxu0 0.0
    %632 = vmatprep.subr.mxu0 0.0
    %633 = vmatpush1.msra.mxu0 0.0
    %634 = vmatprep.subr.mxu0 0.0
    %635 = vmatpush1.msra.mxu0 0.0
    %636 = vmatprep.subr.mxu0 0.0
    %637 = vmatpush1.msra.mxu0 0.0
    %638 = vmatprep.mubr.f32.mxu0 0.0
    %639 = vmatmul.mubr.f32.gmra.mrb[0].mxu0 %v572
    %v640 = vpop.f32.mrb[0].mxu0
    %v641 = vadd.f32 0.0, %v640
    %v642 = vpop.f32.mrb[0].mxu0
    %643 = vdwg.mxu0
    %v645 = vrot.slane %v641, 3
    %v647 = vadd.f32 %v173, %v645
    %v648 = vtanh.pop %v647
    %v650 = vrot.slane %v648, 5
    %v651 = vsel %vm75, %v650, 0
    %653 = vmatprep.subr.mxu0 0.0
    %654 = vmatpush1.msra.mxu0 %v176
    %655 = vmatprep.subr.mxu0 0.0
    %656 = vmatpush1.msra.mxu0 %v177
    %657 = vmatprep.subr.mxu0 0.0
    %658 = vmatpush1.msra.mxu0 %v178
    %659 = vmatprep.subr.mxu0 0.0
    %660 = vmatpush1.msra.mxu0 %v179
    %661 = vmatprep.subr.mxu0 0.0
    %662 = vmatpush1.msra.mxu0 0.0
    %663 = vmatprep.subr.mxu0 0.0
    %664 = vmatpush1.msra.mxu0 0.0
    %665 = vmatprep.subr.mxu0 0.0
    %666 = vmatpush1.msra.mxu0 0.0
    %667 = vmatprep.subr.mxu0 0.0
    %668 = vmatpush1.msra.mxu0 0.0
    %669 = vmatprep.subr.mxu0 0.0
    %670 = vmatpush1.msra.mxu0 0.0
    %671 = vmatprep.subr.mxu0 0.0
    %672 = vmatpush1.msra.mxu0 0.0
    %673 = vmatprep.subr.mxu0 0.0
    %674 = vmatpush1.msra.mxu0 0.0
    %675 = vmatprep.subr.mxu0 0.0
    %676 = vmatpush1.msra.mxu0 0.0
    %677 = vmatprep.subr.mxu0 0.0
    %678 = vmatpush1.msra.mxu0 0.0
    %679 = vmatprep.subr.mxu0 0.0
    %680 = vmatpush1.msra.mxu0 0.0
    %681 = vmatprep.subr.mxu0 0.0
    %682 = vmatpush1.msra.mxu0 0.0
    %683 = vmatprep.subr.mxu0 0.0
    %684 = vmatpush1.msra.mxu0 0.0
    %685 = vmatprep.subr.mxu0 0.0
    %686 = vmatpush1.msra.mxu0 0.0
    %687 = vmatprep.subr.mxu0 0.0
    %688 = vmatpush1.msra.mxu0 0.0
    %689 = vmatprep.subr.mxu0 0.0
    %690 = vmatpush1.msra.mxu0 0.0
    %691 = vmatprep.subr.mxu0 0.0
    %692 = vmatpush1.msra.mxu0 0.0
    %693 = vmatprep.subr.mxu0 0.0
    %694 = vmatpush1.msra.mxu0 0.0
    %695 = vmatprep.subr.mxu0 0.0
    %696 = vmatpush1.msra.mxu0 0.0
    %697 = vmatprep.subr.mxu0 0.0
    %698 = vmatpush1.msra.mxu0 0.0
    %699 = vmatprep.subr.mxu0 0.0
    %700 = vmatpush1.msra.mxu0 0.0
    %701 = vmatprep.subr.mxu0 0.0
    %702 = vmatpush1.msra.mxu0 0.0
    %703 = vmatprep.subr.mxu0 0.0
    %704 = vmatpush1.msra.mxu0 0.0
    %705 = vmatprep.subr.mxu0 0.0
    %706 = vmatpush1.msra.mxu0 0.0
    %707 = vmatprep.subr.mxu0 0.0
    %708 = vmatpush1.msra.mxu0 0.0
    %709 = vmatprep.subr.mxu0 0.0
    %710 = vmatpush1.msra.mxu0 0.0
    %711 = vmatprep.subr.mxu0 0.0
    %712 = vmatpush1.msra.mxu0 0.0
    %713 = vmatprep.subr.mxu0 0.0
    %714 = vmatpush1.msra.mxu0 0.0
    %715 = vmatprep.subr.mxu0 0.0
    %716 = vmatpush1.msra.mxu0 0.0
    %717 = vmatprep.mubr.f32.mxu0 0.0
    %718 = vmatmul.mubr.f32.gmra.mrb[0].mxu0 %v651
    %v719 = vpop.f32.mrb[0].mxu0
    %v720 = vadd.f32 0.0, %v719
    %v721 = vpop.f32.mrb[0].mxu0
    %722 = vdwg.mxu0
    %v724 = vrot.slane %v720, 2
    %v726 = vadd.f32 %v173, %v724
    %v727 = vtanh.pop %v726
    %v729 = vrot.slane %v727, 6
    %v730 = vsel %vm75, %v729, 0
    %732 = vmatprep.subr.mxu0 0.0
    %733 = vmatpush1.msra.mxu0 %v176
    %734 = vmatprep.subr.mxu0 0.0
    %735 = vmatpush1.msra.mxu0 %v177
    %736 = vmatprep.subr.mxu0 0.0
    %737 = vmatpush1.msra.mxu0 %v178
    %738 = vmatprep.subr.mxu0 0.0
    %739 = vmatpush1.msra.mxu0 %v179
    %740 = vmatprep.subr.mxu0 0.0
    %741 = vmatpush1.msra.mxu0 0.0
    %742 = vmatprep.subr.mxu0 0.0
    %743 = vmatpush1.msra.mxu0 0.0
    %744 = vmatprep.subr.mxu0 0.0
    %745 = vmatpush1.msra.mxu0 0.0
    %746 = vmatprep.subr.mxu0 0.0
    %747 = vmatpush1.msra.mxu0 0.0
    %748 = vmatprep.subr.mxu0 0.0
    %749 = vmatpush1.msra.mxu0 0.0
    %750 = vmatprep.subr.mxu0 0.0
    %751 = vmatpush1.msra.mxu0 0.0
    %752 = vmatprep.subr.mxu0 0.0
    %753 = vmatpush1.msra.mxu0 0.0
    %754 = vmatprep.subr.mxu0 0.0
    %755 = vmatpush1.msra.mxu0 0.0
    %756 = vmatprep.subr.mxu0 0.0
    %757 = vmatpush1.msra.mxu0 0.0
    %758 = vmatprep.subr.mxu0 0.0
    %759 = vmatpush1.msra.mxu0 0.0
    %760 = vmatprep.subr.mxu0 0.0
    %761 = vmatpush1.msra.mxu0 0.0
    %762 = vmatprep.subr.mxu0 0.0
    %763 = vmatpush1.msra.mxu0 0.0
    %764 = vmatprep.subr.mxu0 0.0
    %765 = vmatpush1.msra.mxu0 0.0
    %766 = vmatprep.subr.mxu0 0.0
    %767 = vmatpush1.msra.mxu0 0.0
    %768 = vmatprep.subr.mxu0 0.0
    %769 = vmatpush1.msra.mxu0 0.0
    %770 = vmatprep.subr.mxu0 0.0
    %771 = vmatpush1.msra.mxu0 0.0
    %772 = vmatprep.subr.mxu0 0.0
    %773 = vmatpush1.msra.mxu0 0.0
    %774 = vmatprep.subr.mxu0 0.0
    %775 = vmatpush1.msra.mxu0 0.0
    %776 = vmatprep.subr.mxu0 0.0
    %777 = vmatpush1.msra.mxu0 0.0
    %778 = vmatprep.subr.mxu0 0.0
    %779 = vmatpush1.msra.mxu0 0.0
    %780 = vmatprep.subr.mxu0 0.0
    %781 = vmatpush1.msra.mxu0 0.0
    %782 = vmatprep.subr.mxu0 0.0
    %783 = vmatpush1.msra.mxu0 0.0
    %784 = vmatprep.subr.mxu0 0.0
    %785 = vmatpush1.msra.mxu0 0.0
    %786 = vmatprep.subr.mxu0 0.0
    %787 = vmatpush1.msra.mxu0 0.0
    %788 = vmatprep.subr.mxu0 0.0
    %789 = vmatpush1.msra.mxu0 0.0
    %790 = vmatprep.subr.mxu0 0.0
    %791 = vmatpush1.msra.mxu0 0.0
    %792 = vmatprep.subr.mxu0 0.0
    %793 = vmatpush1.msra.mxu0 0.0
    %794 = vmatprep.subr.mxu0 0.0
    %795 = vmatpush1.msra.mxu0 0.0
    %796 = vmatprep.mubr.f32.mxu0 0.0
    %797 = vmatmul.mubr.f32.gmra.mrb[0].mxu0 %v730
    %v798 = vpop.f32.mrb[0].mxu0
    %v799 = vadd.f32 0.0, %v798
    %v800 = vpop.f32.mrb[0].mxu0
    %801 = vdwg.mxu0
    %v803 = vrot.slane %v799, 1
    %v805 = vadd.f32 %v173, %v803
    %v806 = vtanh.pop %v805
    %v807 = vld [vmem:[%s5] sm:$0xff]
    %v808 = vld [vmem:[%s5 + $0x8] sm:$0xff]
    %v809 = vld [vmem:[%s5 + $0x10] sm:$0xff]
    %v810 = vld [vmem:[%s5 + $0x18] sm:$0xff]
    %v811 = vld [vmem:[%s6] sm:$0x1]
    %v813 = vrot.slane %v806, 7
    %v814 = vsel %vm75, %v813, 0
    %816 = vmatprep.subr.mxu0 0.0
    %817 = vmatpush1.msra.mxu0 %v807
    %818 = vmatprep.subr.mxu0 0.0
    %819 = vmatpush1.msra.mxu0 %v808
    %820 = vmatprep.subr.mxu0 0.0
    %821 = vmatpush1.msra.mxu0 %v809
    %822 = vmatprep.subr.mxu0 0.0
    %823 = vmatpush1.msra.mxu0 %v810
    %824 = vmatprep.subr.mxu0 0.0
    %825 = vmatpush1.msra.mxu0 0.0
    %826 = vmatprep.subr.mxu0 0.0
    %827 = vmatpush1.msra.mxu0 0.0
    %828 = vmatprep.subr.mxu0 0.0
    %829 = vmatpush1.msra.mxu0 0.0
    %830 = vmatprep.subr.mxu0 0.0
    %831 = vmatpush1.msra.mxu0 0.0
    %832 = vmatprep.subr.mxu0 0.0
    %833 = vmatpush1.msra.mxu0 0.0
    %834 = vmatprep.subr.mxu0 0.0
    %835 = vmatpush1.msra.mxu0 0.0
    %836 = vmatprep.subr.mxu0 0.0
    %837 = vmatpush1.msra.mxu0 0.0
    %838 = vmatprep.subr.mxu0 0.0
    %839 = vmatpush1.msra.mxu0 0.0
    %840 = vmatprep.subr.mxu0 0.0
    %841 = vmatpush1.msra.mxu0 0.0
    %842 = vmatprep.subr.mxu0 0.0
    %843 = vmatpush1.msra.mxu0 0.0
    %844 = vmatprep.subr.mxu0 0.0
    %845 = vmatpush1.msra.mxu0 0.0
    %846 = vmatprep.subr.mxu0 0.0
    %847 = vmatpush1.msra.mxu0 0.0
    %848 = vmatprep.subr.mxu0 0.0
    %849 = vmatpush1.msra.mxu0 0.0
    %850 = vmatprep.subr.mxu0 0.0
    %851 = vmatpush1.msra.mxu0 0.0
    %852 = vmatprep.subr.mxu0 0.0
    %853 = vmatpush1.msra.mxu0 0.0
    %854 = vmatprep.subr.mxu0 0.0
    %855 = vmatpush1.msra.mxu0 0.0
    %856 = vmatprep.subr.mxu0 0.0
    %857 = vmatpush1.msra.mxu0 0.0
    %858 = vmatprep.subr.mxu0 0.0
    %859 = vmatpush1.msra.mxu0 0.0
    %860 = vmatprep.subr.mxu0 0.0
    %861 = vmatpush1.msra.mxu0 0.0
    %862 = vmatprep.subr.mxu0 0.0
    %863 = vmatpush1.msra.mxu0 0.0
    %864 = vmatprep.subr.mxu0 0.0
    %865 = vmatpush1.msra.mxu0 0.0
    %866 = vmatprep.subr.mxu0 0.0
    %867 = vmatpush1.msra.mxu0 0.0
    %868 = vmatprep.subr.mxu0 0.0
    %869 = vmatpush1.msra.mxu0 0.0
    %870 = vmatprep.subr.mxu0 0.0
    %871 = vmatpush1.msra.mxu0 0.0
    %872 = vmatprep.subr.mxu0 0.0
    %873 = vmatpush1.msra.mxu0 0.0
    %874 = vmatprep.subr.mxu0 0.0
    %875 = vmatpush1.msra.mxu0 0.0
    %876 = vmatprep.subr.mxu0 0.0
    %877 = vmatpush1.msra.mxu0 0.0
    %878 = vmatprep.subr.mxu0 0.0
    %879 = vmatpush1.msra.mxu0 0.0
    %880 = vmatprep.mubr.f32.mxu0 0.0
    %881 = vmatmul.mubr.f32.gmra.mrb[0].mxu0 %v814
    %v882 = vpop.f32.mrb[0].mxu0
    %v883 = vadd.f32 %v811, %v882
    %v884 = vpop.f32.mrb[0].mxu0
    %885 = vdwg.mxu0
    %vm886 = vcmask 57344
    %v887 = vsel %vm886, %v883, -inf
    %888 = vmax.xlane.f32.xlu0 %v887
    %v889 = vpop.xlane.xlu0 %888
    %v890 = vsub.f32 %v883, %v889
    %v891 = vmul.f32 %v890, 1.442695
    %v892 = vpow.pop %v891
    %v893 = vsel %vm886, %v892, 0.0
    %894 = vadd.xlane.f32.xlu0 %v893
    %v895 = vpop.xlane.xlu0 %894
    %v896 = vlog2.pop %v895
    %v897 = vmul.f32 %v896, 0.6931472
    %v898 = vsub.f32 %v890, %v897
    %899 = vst.msk [vmem:[#allocation6] sm:$0x1] %vm886, %v898
    // Predicated region
    $region34: #{tpu_custom_call.1} parent=1 // pred_check
      _
    $region35: #{tpu_custom_call.1} parent=1 // pred_check_branch
      %901 = sbr.rel (0) target = $region37
    $region36: #{tpu_custom_call.1} parent=1 // pred_region
      %s903 = ssub.s32 16, 16
      %904 = vsyncadd [#allocation4], %s903
      %s906 = sshll.u32 [#allocation6], 4
      %s907 = int_to_ptr.vmem [resolvable:$true] %s906
      %909 = dma.vmem_to_hbm [thread:$0]  %s907, 16, %s7, [#allocation4]
    $region37: #{tpu_custom_call.1} parent=1 // pred_fallthru
      _
    // Predicated region
    $region38: #{tpu_custom_call.1} parent=1 // pred_check
      _
    $region39: #{tpu_custom_call.1} parent=1 // pred_check_branch
      %911 = sbr.rel (0) target = $region41
    $region40: #{tpu_custom_call.1} parent=1 // pred_region
      %912 = dma.done [#allocation4], 16
    $region41: #{tpu_custom_call.1} parent=1 // pred_fallthru
      _
    %913 = vsyncpa [#allocation4], 1
    %914 = vsyncpa [#allocation5], 1

</llo_original>
